<compile_context>
chip_gen: v7x
topology: tpu7x:2x2x1
jax: 0.10.0
libtpu: 0.0.40
codegen_flags: <defaults>
</compile_context>

<pallas_src>
import re

import jax
import jax.numpy as jnp
from jax.experimental import pallas as pl
from jax.experimental.pallas import tpu as pltpu


# ----------------------------- Pallas kernel ---------------------------------
def _make_rope_kernel(rot_spec, tile_heads):
    """out = x*cos + rotated(x)*sin on a 2-D (rows, lanes) block.

    rot_spec:
      ("single", shift)                         -> rotated = roll(x, shift); sign baked in sin
      ("select", d_true, d_false, period, thr)  -> rotated[j] = -x[j+d_true] if (j%period)<thr
                                                               else x[j+d_false]
    tile_heads > 1: cos/sin blocks are (rows, D) and are lane-concatenated tile_heads times
    to match the (rows, tile_heads*D) x block (head-folded layout).
    """
    kind = rot_spec[0]

    def rotated(x):
        w = x.shape[-1]
        ax = x.ndim - 1
        if kind == "single":
            return pltpu.roll(x, rot_spec[1], axis=ax)
        _, d_true, d_false, period, thr = rot_spec
        sa = (-d_true) % w
        sb = (-d_false) % w
        a = pltpu.roll(x, sa, axis=ax)                     # a[j] = x[j + d_true]
        b = a if sb == sa else pltpu.roll(x, sb, axis=ax)  # b[j] = x[j + d_false]
        lane = jax.lax.broadcasted_iota(jnp.int32, x.shape, ax)
        mask = (lane % period) < thr
        return jnp.where(mask, -a, b)

    def kernel(x_ref, cos_ref, sin_ref, o_ref):
        x = x_ref[...]
        rx = rotated(x)                                    # roll in x's native dtype (XLU)
        cos = cos_ref[...].astype(jnp.float32)
        sin = sin_ref[...].astype(jnp.float32)
        if tile_heads > 1:                                 # replicate table row across folded heads
            cos = jnp.concatenate([cos] * tile_heads, axis=-1)
            sin = jnp.concatenate([sin] * tile_heads, axis=-1)
        o_ref[...] = (x.astype(jnp.float32) * cos
                      + rx.astype(jnp.float32) * sin).astype(o_ref.dtype)

    return kernel


def rope_apply(x, cos_g, sin_g, rot_spec, transpose_out, *,
               seq_tile_per_head=1024,        # raise toward 2048 on v7x if profiling warrants
               block_bytes_budget=1 << 20):   # target x-block size for the head-folded path
    """x: (B, S, H, D). cos_g / sin_g: (B, S, D) pre-gathered tables.
    Returns (B, S, H, D), or (B, H, S, D) if transpose_out (transpose folded into out spec)."""
    B, S, H, D = x.shape
    cost = pl.CostEstimate(
        flops=4 * B * S * H * D,
        transcendentals=0,
        bytes_accessed=(2 * x.size * x.dtype.itemsize
                        + cos_g.size * cos_g.dtype.itemsize
                        + sin_g.size * sin_g.dtype.itemsize))
    cparams = dict(vmem_limit_bytes=32 * 1024 * 1024)

    if transpose_out:
        # llama / gpt-neox: output (B, H, S, D).  Per-head grid; the (b, s, 0) table block is
        # revisited across the innermost h axis so it is only DMA'd once per (b, seq-tile).
        # TODO(synk): if the strided per-head x reads limit DMA efficiency on v6e/v7x, switch x
        # to memory_space=pl.ANY with a manual contiguous (ts, H, D) copy + per-head output DMA.
        ts = S if S <= seq_tile_per_head else max(8, (seq_tile_per_head // 8) * 8)
        grid = (B, pl.cdiv(S, ts), H)
        return pl.pallas_call(
            _make_rope_kernel(rot_spec, tile_heads=1),
            out_shape=jax.ShapeDtypeStruct((B, H, S, D), x.dtype),
            grid=grid,
            in_specs=[pl.BlockSpec((None, ts, None, D), lambda b, s, h: (b, s, h, 0)),
                      pl.BlockSpec((None, ts, D), lambda b, s, h: (b, s, 0)),
                      pl.BlockSpec((None, ts, D), lambda b, s, h: (b, s, 0))],
            out_specs=pl.BlockSpec((None, None, ts, D), lambda b, s, h: (b, h, s, 0)),
            compiler_params=pltpu.CompilerParams(
                dimension_semantics=("parallel", "parallel", "parallel"), **cparams),
            cost_estimate=cost,
        )(x, cos_g, sin_g)

    # GPT-J: output layout preserved -> fold the heads into the block (contiguous slabs).
    HD = H * D
    xf = x.reshape(B, S, HD)                               # free contiguous reshape
    row_bytes = HD * x.dtype.itemsize
    ts = max(1, block_bytes_budget // row_bytes)
    ts = S if ts >= S else max(8, (ts // 8) * 8)
    n_seq = pl.cdiv(S, ts)
    hb = H
    if B * n_seq == 1 and H % 2 == 0 and ((H // 2) * D) % 128 == 0:
        hb = H // 2                                        # keep >=2 parallel steps (v7x dual-TC)
    grid = (B, n_seq, H // hb)
    out = pl.pallas_call(
        _make_rope_kernel(rot_spec, tile_heads=hb),
        out_shape=jax.ShapeDtypeStruct((B, S, HD), x.dtype),
        grid=grid,
        in_specs=[pl.BlockSpec((None, ts, hb * D), lambda b, s, hg: (b, s, hg)),
                  pl.BlockSpec((None, ts, D), lambda b, s, hg: (b, s, 0)),
                  pl.BlockSpec((None, ts, D), lambda b, s, hg: (b, s, 0))],
        out_specs=pl.BlockSpec((None, ts, hb * D), lambda b, s, hg: (b, s, hg)),
        compiler_params=pltpu.CompilerParams(
            dimension_semantics=("parallel", "parallel", "parallel"), **cparams),
        cost_estimate=cost,
    )(xf, cos_g, sin_g)
    return out.reshape(B, S, H, D)


# ------------------------------- module port ---------------------------------
def _pad_last(t, width, fill):
    cur = t.shape[-1]
    if cur == width:
        return t
    pad = jnp.full(t.shape[:-1] + (width - cur,), fill, dtype=t.dtype)
    return jnp.concatenate([t, pad], axis=-1)


class IPEXRopeRefPallas:
    """JAX/Pallas port of _IPEXRopeRef (RotaryEmbedding tables built in __init__)."""

    def __init__(self, max_position_embeddings, pos_embd_dim, base=10000, backbone=None):
        self.dim = pos_embd_dim
        self.base = base
        self.model_backbone = backbone
        self.inv_freq = 1.0 / (
            base ** (jnp.arange(0, pos_embd_dim, 2, dtype=jnp.float32) / pos_embd_dim)
        )
        self._table_cache = {}
        self._build_cache(max_position_embeddings)

    def _build_cache(self, seq_len):
        # TODO(synk): rebuilding when seq_len > cache is a Python-side (trace-time) effect,
        # not jit-safe; precompute for the true max length in production.
        self.max_seq_len_cached = seq_len
        t = jnp.arange(seq_len, dtype=jnp.float32)
        freqs = t[:, None] * self.inv_freq[None, :]        # (seq, dim/2)
        self.sin_half = jnp.sin(freqs)                     # == sin_cos[:, :dim/2]
        self.cos_half = jnp.cos(freqs)                     # == sin_cos[:, dim/2:]
        emb = jnp.concatenate([freqs, freqs], axis=-1)     # (seq, dim)
        self.cos_cached = jnp.cos(emb)
        self.sin_cached = jnp.sin(emb)
        self._table_cache.clear()

    def _tables(self, mode, head_dim, rot):
        """Full-lane (max_pos, head_dim) tables: cos padded with 1, a single (possibly
        signed) sin padded with 0, plus the static roll/select spec the kernel applies."""
        key = (mode, head_dim, rot)
        hit = self._table_cache.get(key)
        if hit is not None:
            return hit
        D = head_dim
        if mode == "gptj":
            # interleaved rotary (rotate_every_two) on the first `rot` lanes
            sin_il = jnp.repeat(self.sin_half[:, : rot // 2], 2, axis=-1)   # (P, rot)
            cos_il = jnp.repeat(self.cos_half[:, : rot // 2], 2, axis=-1)
            cos_t = _pad_last(cos_il, D, 1.0)
            sin_t = _pad_last(sin_il, D, 0.0)
            rot_spec = ("select", 1, -1, 2, 1)        # even lanes: -x[j+1]; odd lanes: +x[j-1]
        else:
            # rotate_half rotary on the first `rot` lanes (llama: rot == D)
            half = rot // 2
            cos_t = _pad_last(self.cos_cached[:, :rot], D, 1.0)
            sin_p = _pad_last(self.sin_cached[:, :rot], D, 0.0)
            if rot == D:
                j = jnp.arange(D)
                sin_t = jnp.where(j < half, -sin_p, sin_p)
                rot_spec = ("single", half)           # single roll, sign folded into sin
            else:
                sin_t = sin_p
                rot_spec = ("select", half, -half, D, half)
        tables = (cos_t, sin_t, rot_spec)
        self._table_cache[key] = tables
        return tables

    def __call__(self, x, position_ids, num_head, head_dim, offset, rotary_ndims, seq_len=None):
        if seq_len is not None and seq_len > self.max_seq_len_cached:
            self._build_cache(seq_len)
        bb = self.model_backbone
        B, S, H, D = x.shape
        if re.search("GPTJ", bb, re.IGNORECASE):
            rot = rotary_ndims if rotary_ndims is not None else self.dim
            cos_t, sin_t, rot_spec = self._tables("gptj", D, rot)
            transpose_out = False          # output stays (B, S, H, D) -> head-folded path
        elif re.search("llama", bb, re.IGNORECASE):
            cos_t, sin_t, rot_spec = self._tables("half", D, D)
            transpose_out = True           # output (B, H, S, D)
        elif re.search("gptneox", bb, re.IGNORECASE):
            cos_t, sin_t, rot_spec = self._tables("half", D, rotary_ndims)
            transpose_out = True           # output (B, H, S, D)
        else:
            raise AssertionError("Do not support the optimization of your model yet")
        # tiny per-call gather (~1/H of x traffic per table); kept in the wrapper.
        # TODO(synk): for contiguous positions (offset + arange decode), skip this gather and
        # index the cached tables via PrefetchScalarGridSpec scalar-prefetched start offsets.
        cos_g = cos_t[position_ids]                        # (B, S, D)
        sin_g = sin_t[position_ids]
        if jnp.issubdtype(x.dtype, jnp.floating) and x.dtype.itemsize == 2:
            cos_g = cos_g.astype(x.dtype)                  # halve table HBM bytes for bf16/f16 x
            sin_g = sin_g.astype(x.dtype)
        return rope_apply(x, cos_g, sin_g, rot_spec, transpose_out)


# ---------------- pure-JAX references (mirror the torch math) ----------------
def _rotate_every_two_ref(x):
    x1, x2 = x[..., 0::2], x[..., 1::2]
    return jnp.stack([-x2, x1], axis=-1).reshape(x.shape)


def _rotate_half_ref(x):
    h = x.shape[-1] // 2
    return jnp.concatenate([-x[..., h:], x[..., :h]], axis=-1)


def gptj_ref(mod, x, pos_ids, rot):
    sin = jnp.repeat(mod.sin_half[pos_ids], 2, axis=-1)[:, :, None, :]
    cos = jnp.repeat(mod.cos_half[pos_ids], 2, axis=-1)[:, :, None, :]
    xr, xp = x[..., :rot], x[..., rot:]
    out = xr * cos + _rotate_every_two_ref(xr) * sin
    return jnp.concatenate([out, xp], axis=-1)


def llama_ref(mod, x, pos_ids):
    xt = jnp.transpose(x, (0, 2, 1, 3))
    cos = mod.cos_cached[pos_ids][:, None, :, :]
    sin = mod.sin_cached[pos_ids][:, None, :, :]
    return xt * cos + _rotate_half_ref(xt) * sin


def gptneox_ref(mod, x, pos_ids, rot):
    xt = jnp.transpose(x, (0, 2, 1, 3))
    xr, xp = xt[..., :rot], xt[..., rot:]
    cos = mod.cos_cached[pos_ids][:, None, :, :]
    sin = mod.sin_cached[pos_ids][:, None, :, :]
    out = xr * cos + _rotate_half_ref(xr) * sin
    return jnp.concatenate([out, xp], axis=-1)


if __name__ == "__main__":
    key = jax.random.PRNGKey(0)
    B, S, H, Dh = 2, 8, 4, 128      # full 128-lane head dim (production-like, lane-dense)
    max_pos = 32
    rot = 64                        # partial rotary for GPT-J / gpt-neox
    k1, k2, k3 = jax.random.split(key, 3)
    x = jax.random.normal(k1, (B, S, H, Dh), dtype=jnp.float32)
    position_ids = jax.random.randint(k2, (B, S), 0, max_pos, dtype=jnp.int32)
    xq = jax.random.normal(k3, (B, S, H, Dh), dtype=jnp.float32)

    # GPT-J branch (interleaved rotary on first `rot` dims, layout preserved, head-folded blocks)
    rope_gptj = IPEXRopeRefPallas(max_pos, rot, base=10000, backbone="GPTJForCausalLM")
    out_gptj = jax.block_until_ready(rope_gptj(x, position_ids, H, Dh, 1, rot))
    assert out_gptj.shape == (B, S, H, Dh)
    assert jnp.allclose(out_gptj, gptj_ref(rope_gptj, x, position_ids, rot), atol=1e-5)

    # llama branch (full-head rotate-half, output transposed to (B, H, S, Dh))
    rope_llama = IPEXRopeRefPallas(max_pos, Dh, base=10000, backbone="LlamaForCausalLM")
    out_llama = jax.block_until_ready(rope_llama(xq, position_ids, H, Dh, 1, Dh))
    assert out_llama.shape == (B, H, S, Dh)
    assert jnp.allclose(out_llama, llama_ref(rope_llama, xq, position_ids), atol=1e-5)

    # gpt-neox branch (partial rotate-half on first `rot` dims, output (B, H, S, Dh))
    rope_neox = IPEXRopeRefPallas(max_pos, rot, base=10000, backbone="GPTNeoXForCausalLM")
    out_neox = jax.block_until_ready(rope_neox(xq, position_ids, H, Dh, 1, rot))
    assert out_neox.shape == (B, H, S, Dh)
    assert jnp.allclose(out_neox, gptneox_ref(rope_neox, xq, position_ids, rot), atol=1e-5)

    print("KERNEL_OK")
</pallas_src>

<mosaic_0001>
module attributes {stable_mosaic.version = 11 : i64} {
  func.func @kernel(%arg0: i32, %arg1: i32, %arg2: i32, %arg3: memref<1x8x512xf32, #tpu.memory_space<vmem>>, %arg4: memref<1x8x128xf32, #tpu.memory_space<vmem>>, %arg5: memref<1x8x128xf32, #tpu.memory_space<vmem>>, %arg6: memref<1x8x512xf32, #tpu.memory_space<vmem>>) attributes {dimension_semantics = [#tpu.dimension_semantics<parallel>, #tpu.dimension_semantics<parallel>, #tpu.dimension_semantics<parallel>], iteration_bounds = array<i64: 2, 1, 1>, scalar_prefetch = 0 : i64, scratch_operands = 0 : i64, tpu.core_type = #tpu.core_type<tc>, window_params = [{transform_indices = @transform_0, window_bounds = array<i64: 1, 8, 512>}, {transform_indices = @transform_1, window_bounds = array<i64: 1, 8, 128>}, {transform_indices = @transform_2, window_bounds = array<i64: 1, 8, 128>}, {transform_indices = @transform_3, window_bounds = array<i64: 1, 8, 512>}]} {
    %c0 = arith.constant 0 : index
    %c0_0 = arith.constant 0 : index
    %c0_1 = arith.constant 0 : index
    %0 = vector.load %arg3[%c0, %c0_0, %c0_1] : memref<1x8x512xf32, #tpu.memory_space<vmem>>, vector<1x8x512xf32>
    %1 = vector.shape_cast %0 : vector<1x8x512xf32> to vector<8x512xf32>
    %c511_i32 = arith.constant 511 : i32
    %2 = tpu.dynamic_rotate %1 by %c511_i32 dim 1 : vector<8x512xf32>, i32 -> vector<8x512xf32>
    %c1_i32 = arith.constant 1 : i32
    %3 = tpu.dynamic_rotate %1 by %c1_i32 dim 1 : vector<8x512xf32>, i32 -> vector<8x512xf32>
    %4 = tpu.iota {dimensions = array<i32: 1>} : vector<8x512xi32>
    %c2_i32 = arith.constant 2 : i32
    %c0_i32 = arith.constant 0 : i32
    %5 = arith.cmpi eq, %c2_i32, %c0_i32 : i32
    %c1_i32_2 = arith.constant 1 : i32
    %6 = arith.select %5, %c1_i32_2, %c2_i32 : i32
    %7 = vector.broadcast %6 : i32 to vector<8x512xi32>
    %8 = arith.remsi %4, %7 : vector<8x512xi32>
    %c0_i32_3 = arith.constant 0 : i32
    %9 = vector.broadcast %c0_i32_3 : i32 to vector<8x512xi32>
    %10 = arith.cmpi ne, %8, %9 : vector<8x512xi32>
    %c0_i32_4 = arith.constant 0 : i32
    %11 = vector.broadcast %c0_i32_4 : i32 to vector<8x512xi32>
    %12 = arith.cmpi slt, %8, %11 : vector<8x512xi32>
    %c0_i32_5 = arith.constant 0 : i32
    %13 = arith.cmpi slt, %6, %c0_i32_5 : i32
    %14 = vector.broadcast %13 : i1 to vector<8x512xi1>
    %15 = vector.broadcast %14 : vector<8x512xi1> to vector<8x512xi1>
    %16 = arith.xori %12, %15 : vector<8x512xi1>
    %17 = arith.andi %16, %10 : vector<8x512xi1>
    %18 = vector.broadcast %6 : i32 to vector<8x512xi32>
    %19 = arith.addi %8, %18 : vector<8x512xi32>
    %20 = arith.select %17, %19, %8 : vector<8x512xi1>, vector<8x512xi32>
    %c1_i32_6 = arith.constant 1 : i32
    %21 = vector.broadcast %c1_i32_6 : i32 to vector<8x512xi32>
    %22 = arith.cmpi slt, %20, %21 : vector<8x512xi32>
    %cst = arith.constant 0.000000e+00 : f32
    %23 = vector.broadcast %cst : f32 to vector<8x512xf32>
    %24 = arith.subf %23, %2 : vector<8x512xf32>
    %25 = arith.select %22, %24, %3 : vector<8x512xi1>, vector<8x512xf32>
    %c0_7 = arith.constant 0 : index
    %c0_8 = arith.constant 0 : index
    %c0_9 = arith.constant 0 : index
    %26 = vector.load %arg4[%c0_7, %c0_8, %c0_9] : memref<1x8x128xf32, #tpu.memory_space<vmem>>, vector<1x8x128xf32>
    %27 = vector.shape_cast %26 : vector<1x8x128xf32> to vector<8x128xf32>
    %c0_10 = arith.constant 0 : index
    %c0_11 = arith.constant 0 : index
    %c0_12 = arith.constant 0 : index
    %28 = vector.load %arg5[%c0_10, %c0_11, %c0_12] : memref<1x8x128xf32, #tpu.memory_space<vmem>>, vector<1x8x128xf32>
    %29 = vector.shape_cast %28 : vector<1x8x128xf32> to vector<8x128xf32>
    %30 = tpu.concatenate %27, %27, %27, %27 in 1 : vector<8x128xf32>, vector<8x128xf32>, vector<8x128xf32>, vector<8x128xf32> -> vector<8x512xf32>
    %31 = tpu.concatenate %29, %29, %29, %29 in 1 : vector<8x128xf32>, vector<8x128xf32>, vector<8x128xf32>, vector<8x128xf32> -> vector<8x512xf32>
    %32 = arith.mulf %1, %30 : vector<8x512xf32>
    %33 = arith.mulf %25, %31 : vector<8x512xf32>
    %34 = arith.addf %32, %33 : vector<8x512xf32>
    %c0_13 = arith.constant 0 : index
    %c0_14 = arith.constant 0 : index
    %c0_15 = arith.constant 0 : index
    %35 = vector.load %arg6[%c0_13, %c0_14, %c0_15] : memref<1x8x512xf32, #tpu.memory_space<vmem>>, vector<1x8x512xf32>
    %36 = vector.shape_cast %35 : vector<1x8x512xf32> to vector<8x512xf32>
    %37 = vector.shape_cast %34 : vector<8x512xf32> to vector<1x8x512xf32>
    tpu.vector_store %arg6[%c0_13, %c0_14, %c0_15], %37 {strides = array<i32>} : memref<1x8x512xf32, #tpu.memory_space<vmem>>, vector<1x8x512xf32>,
    return
  }
  func.func @transform_0(%arg0: i32, %arg1: i32, %arg2: i32) -> (i32, i32, i32) {
    %c0_i32 = arith.constant 0 : i32
    return %arg0, %arg1, %arg2 : i32, i32, i32
  }
  func.func @transform_1(%arg0: i32, %arg1: i32, %arg2: i32) -> (i32, i32, i32) {
    %c0_i32 = arith.constant 0 : i32
    %c0_i32_0 = arith.constant 0 : i32
    return %arg0, %arg1, %c0_i32 : i32, i32, i32
  }
  func.func @transform_2(%arg0: i32, %arg1: i32, %arg2: i32) -> (i32, i32, i32) {
    %c0_i32 = arith.constant 0 : i32
    %c0_i32_0 = arith.constant 0 : i32
    return %arg0, %arg1, %c0_i32 : i32, i32, i32
  }
  func.func @transform_3(%arg0: i32, %arg1: i32, %arg2: i32) -> (i32, i32, i32) {
    %c0_i32 = arith.constant 0 : i32
    return %arg0, %arg1, %arg2 : i32, i32, i32
  }
}

</mosaic_0001>

<llo_original>
// kernel: tpu_custom_call.1
$region0: #{tpu_custom_call.1}
  #allocation0 [shape = 'u32[]', space=smem, size = 0x4, offset = 0x4, fixed_abs, tag = 'smem constant byte address 0x4 - core index']
  #allocation1 [shape = 'u32[144,128]{1,0:T(1,128)}', space=vmem, size = 0x12000, scoped, tag = 'internal scratch']
  %s0 = inlined_call_operand.hbm [shape: f32[2,8,512], index: 0, kind: input, shape index: {}]
  %s1 = inlined_call_operand.hbm [shape: f32[2,8,128], index: 1, kind: input, shape index: {}]
  %s2 = inlined_call_operand.hbm [shape: f32[2,8,128], index: 2, kind: input, shape index: {}]
  %s3 = inlined_call_operand.hbm [shape: f32[2,8,512], index: 3, kind: output, shape index: {}]
  %s4 = sld [smem:[#allocation0]]
  $region57: #{tpu_custom_call.1} parent=0
    _
  %s6 = ssub.s32 1, %s4
  %s7 = scalar_select 0, %s6, %s4
  $region1: #{tpu_custom_call.1} parent=0
    #allocation2 [shape = 'u8[32768]{0}', space=vmem, size = 0x8000, scoped, tag = 'input window, operand 0']
    #allocation3 [shape = 's32[2]{0}', space=sflag, size = 0x8, scoped, tag = 'scoped memory for tpu_custom_call.1']
    #allocation4 [shape = 's32[2]{0}', space=sflag, size = 0x8, scoped, tag = 'scoped memory for tpu_custom_call.1']
    #allocation5 [shape = 'u8[8192]{0}', space=vmem, size = 0x2000, scoped, tag = 'input window, operand 1']
    #allocation6 [shape = 's32[2]{0}', space=sflag, size = 0x8, scoped, tag = 'scoped memory for tpu_custom_call.1']
    #allocation7 [shape = 'u8[8192]{0}', space=vmem, size = 0x2000, scoped, tag = 'input window, operand 2']
    #allocation8 [shape = 'u8[32768]{0}', space=vmem, size = 0x8000, scoped, tag = 'output window, operand 0']
    %8 = vsyncpa [#allocation3], 0
    %s9 = scalar_lea.sflag [#allocation3], 1
    %10 = vsyncpa %s9, 0
    %11 = vsyncpa [#allocation6], 0
    %s12 = scalar_lea.sflag [#allocation6], 1
    %13 = vsyncpa %s12, 0
    %14 = vsyncpa [#allocation4], 0
    %s15 = scalar_lea.sflag [#allocation4], 1
    %16 = vsyncpa %s15, 0
    loop: start=0, step=1, limit=4
    $region2: #{tpu_custom_call.1} parent=1 // loop_pre_header
      _
    $region3: #{tpu_custom_call.1} parent=1 // loop_header
      %s18 = sphi 0, %s22
      %p19 = scmp.ge.s32.totalorder %s18, 4
      %s25 = sphi 0, %s44
      %s26 = sphi 0, %s40
      %s27 = sphi 0, %s36
      %s28 = sphi 0, %s25
      %s29 = sphi 0, %s26
      %s30 = sphi 0, %s27
      %s31 = sphi 0, %s28
      %s32 = sphi 0, %s29
      %s33 = sphi 0, %s30
      %s51 = sphi 0, %s53
      %s54 = sphi 0, %s51
      %s55 = sphi 0, %s54
      %s71 = sphi 0, %s55
      %s79 = sphi 0, %s81
      %s82 = sphi 0, %s79
      %s83 = sphi 0, %s82
      %s99 = sphi 0, %s83
      %s107 = sphi 0, %s109
      %s110 = sphi 0, %s107
      %s111 = sphi 0, %s110
      %s127 = sphi 0, %s111
      %s137 = sphi 0, %s139
      %s140 = sphi 0, %s137
      %s141 = sphi 0, %s140
      %s157 = sphi 0, %s141
    $region4: #{tpu_custom_call.1} parent=1 // loop_header_branch
      %21 = sbr.rel (%p19) target = $region8
    $region5: #{tpu_custom_call.1} parent=1 // loop_body
      %s23 = ssub.s32 %s18, 1
      %s24 = ssub.s32 %s18, 2
      %s34 = sadd.s32 1, %s27
      %p35 = scmp.ge.s32.totalorder %s34, 1
      %s36 = scalar_select %p35, 0, %s34
      %s37 = sadd.s32 1, %s26
      %s38 = scalar_select %p35, %s37, %s26
      %p39 = scmp.ge.s32.totalorder %s38, 1
      %s40 = scalar_select %p39, 0, %s38
      %s41 = sadd.s32 1, %s25
      %s42 = scalar_select %p39, %s41, %s25
      %p43 = scmp.ge.s32.totalorder %s42, 2
      %s44 = scalar_select %p43, 0, %s42
      %s45 = ssub.s32 %s25, %s44
      %s46 = ssub.s32 %s26, %s40
      %s47 = sor.u32 %s45, %s46
      %s48 = ssub.s32 %s27, %s36
      %s49 = sor.u32 %s47, %s48
      %p50 = scmp.eq.s32.totalorder %s49, 0
      %s52 = sadd.s32 %s51, 1
      %s53 = scalar_select %p50, %s51, %s52
      %p56 = pneg %p50
      %p57 = scmp.eq.s32.totalorder %s18, 1
      %p58 = por %p56, %p57
      %p59 = scmp.ne.s32.totalorder %s51, %s54
      %p60 = scmp.eq.s32.totalorder %s18, 0
      %p61 = por %p59, %p60
      %p62 = scmp.ne.s32.totalorder %s51, %s54
      %p63 = scmp.eq.s32.totalorder %s23, 1
      %p64 = por %p62, %p63
      %p65 = scmp.ne.s32.totalorder %s54, %s55
      %p66 = scmp.eq.s32.totalorder %s23, 0
      %p67 = por %p65, %p66
      %p68 = scmp.ne.s32.totalorder %s54, %s55
      %p69 = scmp.eq.s32.totalorder %s24, 1
      %p70 = por %p68, %p69
      %p72 = scmp.ne.s32.totalorder %s55, %s71
      %p73 = scmp.eq.s32.totalorder %s24, 0
      %p74 = por %p72, %p73
      %s75 = ssub.s32 %s25, %s44
      %s76 = ssub.s32 %s26, %s40
      %s77 = sor.u32 %s75, %s76
      %p78 = scmp.eq.s32.totalorder %s77, 0
      %s80 = sadd.s32 %s79, 1
      %s81 = scalar_select %p78, %s79, %s80
      %p84 = pneg %p78
      %p85 = scmp.eq.s32.totalorder %s18, 1
      %p86 = por %p84, %p85
      %p87 = scmp.ne.s32.totalorder %s79, %s82
      %p88 = scmp.eq.s32.totalorder %s18, 0
      %p89 = por %p87, %p88
      %p90 = scmp.ne.s32.totalorder %s79, %s82
      %p91 = scmp.eq.s32.totalorder %s23, 1
      %p92 = por %p90, %p91
      %p93 = scmp.ne.s32.totalorder %s82, %s83
      %p94 = scmp.eq.s32.totalorder %s23, 0
      %p95 = por %p93, %p94
      %p96 = scmp.ne.s32.totalorder %s82, %s83
      %p97 = scmp.eq.s32.totalorder %s24, 1
      %p98 = por %p96, %p97
      %p100 = scmp.ne.s32.totalorder %s83, %s99
      %p101 = scmp.eq.s32.totalorder %s24, 0
      %p102 = por %p100, %p101
      %s103 = ssub.s32 %s25, %s44
      %s104 = ssub.s32 %s26, %s40
      %s105 = sor.u32 %s103, %s104
      %p106 = scmp.eq.s32.totalorder %s105, 0
      %s108 = sadd.s32 %s107, 1
      %s109 = scalar_select %p106, %s107, %s108
      %p112 = pneg %p106
      %p113 = scmp.eq.s32.totalorder %s18, 1
      %p114 = por %p112, %p113
      %p115 = scmp.ne.s32.totalorder %s107, %s110
      %p116 = scmp.eq.s32.totalorder %s18, 0
      %p117 = por %p115, %p116
      %p118 = scmp.ne.s32.totalorder %s107, %s110
      %p119 = scmp.eq.s32.totalorder %s23, 1
      %p120 = por %p118, %p119
      %p121 = scmp.ne.s32.totalorder %s110, %s111
      %p122 = scmp.eq.s32.totalorder %s23, 0
      %p123 = por %p121, %p122
      %p124 = scmp.ne.s32.totalorder %s110, %s111
      %p125 = scmp.eq.s32.totalorder %s24, 1
      %p126 = por %p124, %p125
      %p128 = scmp.ne.s32.totalorder %s111, %s127
      %p129 = scmp.eq.s32.totalorder %s24, 0
      %p130 = por %p128, %p129
      %s131 = ssub.s32 %s25, %s44
      %s132 = ssub.s32 %s26, %s40
      %s133 = sor.u32 %s131, %s132
      %s134 = ssub.s32 %s27, %s36
      %s135 = sor.u32 %s133, %s134
      %p136 = scmp.eq.s32.totalorder %s135, 0
      %s138 = sadd.s32 %s137, 1
      %s139 = scalar_select %p136, %s137, %s138
      %p142 = pneg %p136
      %p143 = scmp.eq.s32.totalorder %s18, 1
      %p144 = por %p142, %p143
      %p145 = scmp.ne.s32.totalorder %s137, %s140
      %p146 = scmp.eq.s32.totalorder %s18, 0
      %p147 = por %p145, %p146
      %p148 = scmp.ne.s32.totalorder %s137, %s140
      %p149 = scmp.eq.s32.totalorder %s23, 1
      %p150 = por %p148, %p149
      %p151 = scmp.ne.s32.totalorder %s140, %s141
      %p152 = scmp.eq.s32.totalorder %s23, 0
      %p153 = por %p151, %p152
      %p154 = scmp.ne.s32.totalorder %s140, %s141
      %p155 = scmp.eq.s32.totalorder %s24, 1
      %p156 = por %p154, %p155
      %p158 = scmp.ne.s32.totalorder %s141, %s157
      %p159 = scmp.eq.s32.totalorder %s24, 0
      %p160 = por %p158, %p159
      %p161 = scmp.le.s32.totalorder 1, %s18
      %p162 = scmp.lt.s32.totalorder %s18, 3
      %p163 = pnand %p161, %p162
      %p164 = pneg %p163
      // Predicated region
      $region9: #{tpu_custom_call.1} parent=5 // pred_check
        _
      $region10: #{tpu_custom_call.1} parent=5 // pred_check_branch
        %166 = sbr.rel (%p163) target = $region12
      $region11: #{tpu_custom_call.1} parent=5 // pred_region
        %s167 = ssub.s32 %s18, 1
      $region12: #{tpu_custom_call.1} parent=5 // pred_fallthru
        _
      %p168 = scmp.lt.s32.totalorder %s18, 2
      // Predicated region
      $region13: #{tpu_custom_call.1} parent=5 // pred_check
        %p169 = pneg %p168
      $region14: #{tpu_custom_call.1} parent=5 // pred_check_branch
        %171 = sbr.rel (%p169) target = $region16
      $region15: #{tpu_custom_call.1} parent=5 // pred_region
        // Predicated region
        $region17: #{tpu_custom_call.1} parent=15 // pred_check
          %p172 = pneg %p61
        $region18: #{tpu_custom_call.1} parent=15 // pred_check_branch
          %174 = sbr.rel (%p172) target = $region20
        $region19: #{tpu_custom_call.1} parent=15 // pred_region
          %s175 = sand.u32 %s51, 1
          %s176 = scalar_lea.sflag [#allocation3], %s175
          %s177 = sand.u32 %s51, 1
          %s178 = smul.addr %s177, 32
          %s179 = scalar_lea.vmem [#allocation2], %s178
          %s180 = smul.u32 4, %s27
          %s182 = ssub.s32 512, 512
          %183 = vsyncadd %s176, %s182
          %s184 = smul.addr %s26, 4
          %s185 = sadd.s32 %s180, %s184
          %s186 = smul.addr %s25, 4
          %s187 = sadd.s32 %s185, %s186
          %s188 = smul.addr %s187, 128
          %s189 = scalar_lea.hbm %s0, %s188
          %s191 = sshll.u32 %s179, 4
          %s192 = int_to_ptr.vmem [resolvable:$true] %s191
          %194 = dma.hbm_to_vmem [thread:$0]  %s189, 512, %s192, %s176
        $region20: #{tpu_custom_call.1} parent=15 // pred_fallthru
          _
        // Predicated region
        $region21: #{tpu_custom_call.1} parent=15 // pred_check
          %p195 = pneg %p89
        $region22: #{tpu_custom_call.1} parent=15 // pred_check_branch
          %197 = sbr.rel (%p195) target = $region24
        $region23: #{tpu_custom_call.1} parent=15 // pred_region
          %s198 = sand.u32 %s18, 1
          %s199 = scalar_lea.sflag [#allocation6], %s198
          %s200 = sand.u32 %s79, 1
          %s201 = smul.addr %s200, 8
          %s202 = scalar_lea.vmem [#allocation5], %s201
          %s204 = ssub.s32 128, 128
          %205 = vsyncadd %s199, %s204
          %s206 = sadd.s32 %s26, %s25
          %s207 = smul.addr %s206, 128
          %s208 = scalar_lea.hbm %s1, %s207
          %s210 = sshll.u32 %s202, 4
          %s211 = int_to_ptr.vmem [resolvable:$true] %s210
          %213 = dma.hbm_to_vmem [thread:$0]  %s208, 128, %s211, %s199
        $region24: #{tpu_custom_call.1} parent=15 // pred_fallthru
          _
        // Predicated region
        $region25: #{tpu_custom_call.1} parent=15 // pred_check
          %p214 = pneg %p117
        $region26: #{tpu_custom_call.1} parent=15 // pred_check_branch
          %216 = sbr.rel (%p214) target = $region28
        $region27: #{tpu_custom_call.1} parent=15 // pred_region
          %s217 = sand.u32 %s18, 1
          %s218 = scalar_lea.sflag [#allocation6], %s217
          %s219 = sand.u32 %s107, 1
          %s220 = smul.addr %s219, 8
          %s221 = scalar_lea.vmem [#allocation7], %s220
          %s223 = ssub.s32 128, 128
          %224 = vsyncadd %s218, %s223
          %s225 = sadd.s32 %s26, %s25
          %s226 = smul.addr %s225, 128
          %s227 = scalar_lea.hbm %s2, %s226
          %s229 = sshll.u32 %s221, 4
          %s230 = int_to_ptr.vmem [resolvable:$true] %s229
          %232 = dma.hbm_to_vmem [thread:$0]  %s227, 128, %s230, %s218
        $region28: #{tpu_custom_call.1} parent=15 // pred_fallthru
          _
      $region16: #{tpu_custom_call.1} parent=5 // pred_fallthru
        _
      %p233 = scmp.le.s32.totalorder 1, %s18
      %p234 = scmp.lt.s32.totalorder %s18, 3
      %p235 = pnand %p233, %p234
      %p236 = pneg %p235
      // Predicated region
      $region29: #{tpu_custom_call.1} parent=5 // pred_check
        _
      $region30: #{tpu_custom_call.1} parent=5 // pred_check_branch
        %238 = sbr.rel (%p235) target = $region32
      $region31: #{tpu_custom_call.1} parent=5 // pred_region
        %s239 = ssub.s32 %s18, 1
        %s240 = sand.u32 %s54, 1
        %s241 = scalar_lea.sflag [#allocation3], %s240
        %s242 = sand.u32 %s54, 1
        %s243 = smul.addr %s242, 32
        %s244 = scalar_lea.vmem [#allocation2], %s243
        // Predicated region
        $region33: #{tpu_custom_call.1} parent=31 // pred_check
          %p245 = pneg %p67
        $region34: #{tpu_custom_call.1} parent=31 // pred_check_branch
          %247 = sbr.rel (%p245) target = $region36
        $region35: #{tpu_custom_call.1} parent=31 // pred_region
          %248 = dma.done %s241, 512
        $region36: #{tpu_custom_call.1} parent=31 // pred_fallthru
          _
        %s249 = sand.u32 %s23, 1
        %s250 = scalar_lea.sflag [#allocation6], %s249
        %s251 = sand.u32 %s82, 1
        %s252 = smul.addr %s251, 8
        %s253 = scalar_lea.vmem [#allocation5], %s252
        // Predicated region
        $region37: #{tpu_custom_call.1} parent=31 // pred_check
          %p254 = pneg %p95
        $region38: #{tpu_custom_call.1} parent=31 // pred_check_branch
          %256 = sbr.rel (%p254) target = $region40
        $region39: #{tpu_custom_call.1} parent=31 // pred_region
          %257 = dma.done %s250, 128
        $region40: #{tpu_custom_call.1} parent=31 // pred_fallthru
          _
        %s258 = sand.u32 %s23, 1
        %s259 = scalar_lea.sflag [#allocation6], %s258
        %s260 = sand.u32 %s110, 1
        %s261 = smul.addr %s260, 8
        %s262 = scalar_lea.vmem [#allocation7], %s261
        // Predicated region
        $region41: #{tpu_custom_call.1} parent=31 // pred_check
          %p263 = pneg %p123
        $region42: #{tpu_custom_call.1} parent=31 // pred_check_branch
          %265 = sbr.rel (%p263) target = $region44
        $region43: #{tpu_custom_call.1} parent=31 // pred_region
          %266 = dma.done %s259, 128
        $region44: #{tpu_custom_call.1} parent=31 // pred_fallthru
          _
        %s267 = sand.u32 %s54, 1
        %s268 = scalar_lea.sflag [#allocation3], %s267
        %s269 = sand.u32 %s54, 1
        %s270 = smul.addr %s269, 32
        %s271 = scalar_lea.vmem [#allocation2], %s270
        %p272 = pneg %p67
        %p273 = pneg %p64
        %s274 = sand.u32 %s23, 1
        %s275 = scalar_lea.sflag [#allocation6], %s274
        %s276 = sand.u32 %s82, 1
        %s277 = smul.addr %s276, 8
        %s278 = scalar_lea.vmem [#allocation5], %s277
        %p279 = pneg %p95
        %p280 = pneg %p92
        %s281 = sand.u32 %s23, 1
        %s282 = scalar_lea.sflag [#allocation6], %s281
        %s283 = sand.u32 %s110, 1
        %s284 = smul.addr %s283, 8
        %s285 = scalar_lea.vmem [#allocation7], %s284
        %p286 = pneg %p123
        %p287 = pneg %p120
        %p288 = pneg %p153
        %p289 = pneg %p150
        %s290 = sand.u32 %s140, 1
        %s291 = scalar_lea.sflag [#allocation4], %s290
        %s292 = sand.u32 %s140, 1
        %s293 = smul.addr %s292, 32
        %s294 = scalar_lea.vmem [#allocation8], %s293
        %s295 = smul.u32 4, %s30
        %s296 = smul.u32 4, %s30
        %v297 = vld [vmem:[%s244] sm:$0xff]
        %v298 = vld [vmem:[%s244 + $0x8] sm:$0xff]
        %v299 = vld [vmem:[%s244 + $0x10] sm:$0xff]
        %v300 = vld [vmem:[%s244 + $0x18] sm:$0xff]
        %301 = vrot.lane.b32.xlu0 %v297, 127
        %v302 = vpop.permute.xlu0 %301
        %303 = vrot.lane.b32.xlu0 %v298, 127
        %v304 = vpop.permute.xlu0 %303
        %305 = vrot.lane.b32.xlu0 %v299, 127
        %v306 = vpop.permute.xlu0 %305
        %307 = vrot.lane.b32.xlu0 %v300, 127
        %v308 = vpop.permute.xlu0 %307
        %v309 = vlaneseq
        %v310 = vand.u32 %v309, 127
        %vm311 = vcmp.lt.s32.totalorder %v310, 127
        %v312 = vsel %vm311, %v306, %v308
        %v313 = vsel %vm311, %v304, %v306
        %v314 = vsel %vm311, %v302, %v304
        %v315 = vsel %vm311, %v308, %v302
        %316 = vrot.lane.b32.xlu0 %v297, 1
        %v317 = vpop.permute.xlu0 %316
        %318 = vrot.lane.b32.xlu0 %v298, 1
        %v319 = vpop.permute.xlu0 %318
        %320 = vrot.lane.b32.xlu0 %v299, 1
        %v321 = vpop.permute.xlu0 %320
        %322 = vrot.lane.b32.xlu0 %v300, 1
        %v323 = vpop.permute.xlu0 %322
        %vm324 = vcmp.lt.s32.totalorder %v310, 1
        %v325 = vsel %vm324, %v321, %v323
        %v326 = vsel %vm324, %v319, %v321
        %v327 = vsel %vm324, %v317, %v319
        %v328 = vsel %vm324, %v323, %v317
        %v329 = vadd.s32 %v310, 128
        %v330 = vadd.s32 %v310, 256
        %v331 = vadd.s32 %v310, 384
        %vm332 = vcmp.lt.s32.totalorder %v310, 0
        %v333 = vsub.s32 0, %v310
        %v334 = vsel %vm332, %v333, %v310
        %v335 = vshrl.u32 %v334, 1
        %v336 = vand.u32 %v334, 1
        %v337 = vsub.s32 0, %v336
        %v338 = vsel %vm332, %v337, %v336
        %vm339 = vcmp.lt.s32.totalorder %v329, 0
        %v340 = vsub.s32 0, %v329
        %v341 = vsel %vm339, %v340, %v329
        %v342 = vshrl.u32 %v341, 1
        %v343 = vand.u32 %v341, 1
        %v344 = vsub.s32 0, %v343
        %v345 = vsel %vm339, %v344, %v343
        %vm346 = vcmp.lt.s32.totalorder %v330, 0
        %v347 = vsub.s32 0, %v330
        %v348 = vsel %vm346, %v347, %v330
        %v349 = vshrl.u32 %v348, 1
        %v350 = vand.u32 %v348, 1
        %v351 = vsub.s32 0, %v350
        %v352 = vsel %vm346, %v351, %v350
        %vm353 = vcmp.lt.s32.totalorder %v331, 0
        %v354 = vsub.s32 0, %v331
        %v355 = vsel %vm353, %v354, %v331
        %v356 = vshrl.u32 %v355, 1
        %v357 = vand.u32 %v355, 1
        %v358 = vsub.s32 0, %v357
        %v359 = vsel %vm353, %v358, %v357
        %vm360 = vcmp.ne.s32.totalorder %v338, 0
        %vm361 = vcmp.ne.s32.totalorder %v345, 0
        %vm362 = vcmp.ne.s32.totalorder %v352, 0
        %vm363 = vcmp.ne.s32.totalorder %v359, 0
        %vm364 = vcmp.lt.s32.totalorder %v338, 0
        %vm365 = vcmp.lt.s32.totalorder %v345, 0
        %vm366 = vcmp.lt.s32.totalorder %v352, 0
        %vm367 = vcmp.lt.s32.totalorder %v359, 0
        %vm368 = vmand %vm364, %vm360
        %vm369 = vmand %vm365, %vm361
        %vm370 = vmand %vm366, %vm362
        %vm371 = vmand %vm367, %vm363
        %v372 = vadd.s32 %v338, 2
        %v373 = vadd.s32 %v345, 2
        %v374 = vadd.s32 %v352, 2
        %v375 = vadd.s32 %v359, 2
        %v376 = vsel %vm368, %v372, %v338
        %v377 = vsel %vm369, %v373, %v345
        %v378 = vsel %vm370, %v374, %v352
        %v379 = vsel %vm371, %v375, %v359
        %vm380 = vcmp.lt.s32.totalorder %v376, 1
        %vm381 = vcmp.lt.s32.totalorder %v377, 1
        %vm382 = vcmp.lt.s32.totalorder %v378, 1
        %vm383 = vcmp.lt.s32.totalorder %v379, 1
        %v384 = vsub.f32 0.0, %v314
        %v385 = vsub.f32 0.0, %v313
        %v386 = vsub.f32 0.0, %v312
        %v387 = vsub.f32 0.0, %v315
        %v388 = vsel %vm380, %v384, %v328
        %v389 = vsel %vm381, %v385, %v327
        %v390 = vsel %vm382, %v386, %v326
        %v391 = vsel %vm383, %v387, %v325
        %v392 = vld [vmem:[%s253] sm:$0xff]
        %v393 = vld [vmem:[%s262] sm:$0xff]
        %v394 = vmul.f32 %v297, %v392
        %v395 = vmul.f32 %v298, %v392
        %v396 = vmul.f32 %v299, %v392
        %v397 = vmul.f32 %v300, %v392
        %v398 = vmul.f32 %v388, %v393
        %v399 = vmul.f32 %v389, %v393
        %v400 = vmul.f32 %v390, %v393
        %v401 = vmul.f32 %v391, %v393
        %v402 = vadd.f32 %v394, %v398
        %v403 = vadd.f32 %v395, %v399
        %v404 = vadd.f32 %v396, %v400
        %v405 = vadd.f32 %v397, %v401
        %406 = vst [vmem:[%s294] sm:$0xff] %v402
        %407 = vst [vmem:[%s294 + $0x8] sm:$0xff] %v403
        %408 = vst [vmem:[%s294 + $0x10] sm:$0xff] %v404
        %409 = vst [vmem:[%s294 + $0x18] sm:$0xff] %v405
        %s410 = sand.u32 %s140, 1
        %s411 = scalar_lea.sflag [#allocation4], %s410
        %s412 = sand.u32 %s140, 1
        %s413 = smul.addr %s412, 32
        %s414 = scalar_lea.vmem [#allocation8], %s413
        // Predicated region
        $region45: #{tpu_custom_call.1} parent=31 // pred_check
          %p415 = pneg %p150
        $region46: #{tpu_custom_call.1} parent=31 // pred_check_branch
          %417 = sbr.rel (%p415) target = $region48
        $region47: #{tpu_custom_call.1} parent=31 // pred_region
          %s418 = smul.u32 4, %s30
          %s420 = ssub.s32 512, 512
          %421 = vsyncadd %s411, %s420
          %s422 = smul.addr %s29, 4
          %s423 = sadd.s32 %s418, %s422
          %s424 = smul.addr %s28, 4
          %s425 = sadd.s32 %s423, %s424
          %s426 = smul.addr %s425, 128
          %s427 = scalar_lea.hbm %s3, %s426
          %s429 = sshll.u32 %s414, 4
          %s430 = int_to_ptr.vmem [resolvable:$true] %s429
          %432 = dma.vmem_to_hbm [thread:$0]  %s430, 512, %s427, %s411
        $region48: #{tpu_custom_call.1} parent=31 // pred_fallthru
          _
      $region32: #{tpu_custom_call.1} parent=5 // pred_fallthru
        _
      %p433 = scmp.le.s32.totalorder 2, %s18
      // Predicated region
      $region49: #{tpu_custom_call.1} parent=5 // pred_check
        %p434 = pneg %p433
      $region50: #{tpu_custom_call.1} parent=5 // pred_check_branch
        %436 = sbr.rel (%p434) target = $region52
      $region51: #{tpu_custom_call.1} parent=5 // pred_region
        %s437 = ssub.s32 %s18, 2
        // Predicated region
        $region53: #{tpu_custom_call.1} parent=51 // pred_check
          %p438 = pneg %p156
        $region54: #{tpu_custom_call.1} parent=51 // pred_check_branch
          %440 = sbr.rel (%p438) target = $region56
        $region55: #{tpu_custom_call.1} parent=51 // pred_region
          %s441 = sand.u32 %s141, 1
          %s442 = scalar_lea.sflag [#allocation4], %s441
          %s443 = sand.u32 %s141, 1
          %s444 = smul.addr %s443, 32
          %s445 = scalar_lea.vmem [#allocation8], %s444
          %446 = dma.done %s442, 512
        $region56: #{tpu_custom_call.1} parent=51 // pred_fallthru
          _
      $region52: #{tpu_custom_call.1} parent=5 // pred_fallthru
        _
    $region6: #{tpu_custom_call.1} parent=1 // loop_footer
      %s22 = sadd.s32 1, %s18
    $region7: #{tpu_custom_call.1} parent=1 // loop_footer_branch
      %17 = sbr.rel target = $region3
    $region8: #{tpu_custom_call.1} parent=1 // loop_exit
      _
    %447 = vsyncpa [#allocation3], 1
    %s448 = scalar_lea.sflag [#allocation3], 1
    %449 = vsyncpa %s448, 1
    %450 = vsyncpa [#allocation6], 1
    %s451 = scalar_lea.sflag [#allocation6], 1
    %452 = vsyncpa %s451, 1
    %453 = vsyncpa [#allocation4], 1
    %s454 = scalar_lea.sflag [#allocation4], 1
    %455 = vsyncpa %s454, 1

</llo_original>
